<compile_context>
chip_gen: v5e
topology: v5e:2x2
jax: 0.10.0
libtpu: 0.0.40
codegen_flags: <defaults>
</compile_context>

<pallas_src>
import functools

import jax
import jax.numpy as jnp
from jax.experimental import pallas as pl
from jax.experimental.pallas import tpu as pltpu

_MiB = 1024 * 1024


def _pair_mean_kernel(a_ref, b_ref, o_ref):
    """Grouped fast path: dense pair-average o = (a + b) / 2, f32 accumulation."""
    acc = a_ref[...].astype(jnp.float32) + b_ref[...].astype(jnp.float32)
    o_ref[...] = (acc * 0.5).astype(o_ref.dtype)


def _pair_mean_strided_kernel(x_ref, o_ref, *, factor):
    """Fallback: x_ref holds factor*tl_out (or L) rows; strided reads pick the pair."""
    tl_out = o_ref.shape[0]
    a = x_ref[pl.ds(0, tl_out, stride=factor), :].astype(jnp.float32)  # rows k*factor
    b = x_ref[pl.ds(1, tl_out, stride=factor), :].astype(jnp.float32)  # rows k*factor+1
    o_ref[...] = ((a + b) * 0.5).astype(o_ref.dtype)


def downsampling_mean(x: jax.Array, factor: int,
                      *, target_step_bytes: int = 4 * _MiB) -> jax.Array:
    """Pallas implementation of Downsampling_Mean(factor)(x) for x of shape (B, L, D)."""
    B, L, D = x.shape
    if L < 2:
        raise ValueError("sequence length must be >= 2")
    out_len = pl.cdiv(L - 1, factor)          # == len(range(0, L-1, factor))
    # PyTorch's `/ 2` promotes integer inputs to float; keep float outputs.
    out_dtype = x.dtype if jnp.issubdtype(x.dtype, jnp.floating) else jnp.float32

    if factor == 1:
        # Degenerate config: every adjacent pair straddles a tile boundary (1-row
        # halo).  XLA fuses slice+add+mul into an HBM-roofline elementwise loop, and
        # this avoids pinning the whole (L, D) slice in VMEM for long sequences.
        xf = x.astype(jnp.float32)
        return ((xf[:, :-1] + xf[:, 1:]) * 0.5).astype(out_dtype)

    in_itemsize = jnp.dtype(x.dtype).itemsize
    out_itemsize = jnp.dtype(out_dtype).itemsize
    grouped = (L % factor == 0) and (D % 128 == 0)

    # HBM traffic + f32 upcast temporaries per output row per step.
    rows_read = 2 if grouped else factor
    bytes_per_row = D * (rows_read * in_itemsize + out_itemsize) + 3 * D * 4

    # Output rows per step (per batch element): sublane-aligned, sized so one step
    # moves ~target_step_bytes (measured HBM-roofline sweet spot is ~1-4 MiB blocks).
    tl_out = int(target_step_bytes // max(1, bytes_per_row))
    if tl_out >= out_len:
        tl_out = out_len
    else:
        tl_out = min(max(8, (tl_out // 8) * 8), out_len)

    # Batch-block when one whole batch row still leaves the step tiny, so the
    # ~0.35us per-grid-step overhead stops dominating small (L, D) configs.
    if tl_out == out_len:
        per_batch = out_len * bytes_per_row
        tb = max(1, min(B, int(target_step_bytes // max(1, per_batch))))
    else:
        tb = 1

    grid_l = pl.cdiv(out_len, tl_out)

    if grouped:
        in_block = 2 * tb * tl_out * D * in_itemsize
        out_block = tb * tl_out * D * out_itemsize
        temps = 3 * tb * tl_out * D * 4
    else:
        tl_in = L if tl_out == out_len else tl_out * factor
        in_block = tl_in * D * in_itemsize
        out_block = tl_out * D * out_itemsize
        temps = 3 * tl_out * D * 4
    resident = 2 * in_block + 2 * out_block + temps   # double-buffered I/O + f32 temps

    # Explicit scoped-VMEM limit: raise above v5e/v6e defaults when the blocks want
    # it, but stay well under v7x's 64 MiB physical VMEM per TensorCore.
    vmem_limit = min(max(24 * _MiB, 2 * resident), 48 * _MiB)
    try:  # generation-aware ceiling when the query is available
        cap = int(pltpu.get_tpu_info().vmem_capacity_bytes)
        vmem_limit = min(vmem_limit, (cap * 3) // 4)
    except Exception:
        pass
    vmem_limit = max(vmem_limit, resident + 2 * _MiB)  # never starve the chosen blocks

    compiler_params = pltpu.CompilerParams(
        # Every grid step writes a disjoint output tile, so both axes can be
        # sharded across TensorCores (v7x megacore).
        dimension_semantics=("parallel", "parallel"),
        vmem_limit_bytes=int(vmem_limit),
    )
    out_shape = jax.ShapeDtypeStruct((B, out_len, D), out_dtype)

    if grouped:
        # Free row-major merge: group g holds rows [g*factor, (g+1)*factor) as
        # `factor` lane-blocks of width D; only lane-blocks 0 and 1 are DMA'd.
        xg = x.reshape(B, L // factor, factor * D)
        return pl.pallas_call(
            _pair_mean_kernel,
            out_shape=out_shape,
            grid=(pl.cdiv(B, tb), grid_l),
            in_specs=[
                pl.BlockSpec((tb, tl_out, D), lambda b, t: (b, t, 0)),  # rows k*factor
                pl.BlockSpec((tb, tl_out, D), lambda b, t: (b, t, 1)),  # rows k*factor+1
            ],
            out_specs=pl.BlockSpec((tb, tl_out, D), lambda b, t: (b, t, 0)),
            compiler_params=compiler_params,
        )(xg, xg)

    # Contiguous fallback (L % factor != 0 or D % 128 != 0): DMA factor*tl_out rows
    # per step and pick the pair with strided sublane reads.
    kernel = functools.partial(_pair_mean_strided_kernel, factor=factor)
    return pl.pallas_call(
        kernel,
        out_shape=out_shape,
        grid=(B, grid_l),
        in_specs=[pl.BlockSpec((None, tl_in, D), lambda b, t: (b, t, 0))],
        out_specs=pl.BlockSpec((None, tl_out, D), lambda b, t: (b, t, 0)),
        compiler_params=compiler_params,
    )(x)


def _ref(x, factor):
    xf = x.astype(jnp.float32)
    return (xf[:, : x.shape[1] - 1 : factor] + xf[:, 1::factor]) * 0.5


if __name__ == "__main__":
    key = jax.random.PRNGKey(0)
    B = 2
    cases = [
        # (L,   D,   factor, dtype,        target_step_bytes)
        (16,  128, 2, jnp.float32, None),       # main config: grouped path, batch-blocked
        (200, 128, 2, jnp.float32, 32 * 1024),  # grouped path, tiled L + partial last tile
        (48,  128, 4, jnp.float32, None),       # grouped path, factor > 2 (no over-read)
        (23,  128, 3, jnp.float32, None),       # contiguous fallback (L % factor != 0)
        (16,  128, 1, jnp.float32, None),       # degenerate factor == 1 (XLA fallback)
        (32,  128, 2, jnp.bfloat16, None),      # grouped path, packed dtype
    ]
    for i, (L, D, f, dt, tgt) in enumerate(cases):
        k = jax.random.fold_in(key, i)
        x = jax.random.normal(k, (B, L, D), dtype=jnp.float32).astype(dt)
        kwargs = {} if tgt is None else {"target_step_bytes": tgt}
        out = jax.block_until_ready(downsampling_mean(x, f, **kwargs))
        ref = _ref(x, f)
        assert out.shape == ref.shape, (L, f, out.shape, ref.shape)
        tol = 2e-2 if dt == jnp.bfloat16 else 1e-6
        assert jnp.allclose(out.astype(jnp.float32), ref, atol=tol, rtol=tol), (
            f"mismatch for L={L}, D={D}, factor={f}, dtype={dt}")
    print("KERNEL_OK")
</pallas_src>

<mosaic_0001>
module attributes {stable_mosaic.version = 11 : i64} {
  func.func @_pair_mean_kernel(%arg0: i32, %arg1: i32, %arg2: memref<2x8x128xf32, #tpu.memory_space<vmem>>, %arg3: memref<2x8x128xf32, #tpu.memory_space<vmem>>, %arg4: memref<2x8x128xf32, #tpu.memory_space<vmem>>) attributes {dimension_semantics = [#tpu.dimension_semantics<parallel>, #tpu.dimension_semantics<parallel>], iteration_bounds = array<i64: 1, 1>, scalar_prefetch = 0 : i64, scratch_operands = 0 : i64, tpu.core_type = #tpu.core_type<tc>, window_params = [{transform_indices = @transform_0, window_bounds = array<i64: 2, 8, 128>}, {transform_indices = @transform_1, window_bounds = array<i64: 2, 8, 128>}, {transform_indices = @transform_2, window_bounds = array<i64: 2, 8, 128>}]} {
    %c0 = arith.constant 0 : index
    %c0_0 = arith.constant 0 : index
    %c0_1 = arith.constant 0 : index
    %0 = vector.load %arg2[%c0, %c0_0, %c0_1] : memref<2x8x128xf32, #tpu.memory_space<vmem>>, vector<2x8x128xf32>
    %c0_2 = arith.constant 0 : index
    %c0_3 = arith.constant 0 : index
    %c0_4 = arith.constant 0 : index
    %1 = vector.load %arg3[%c0_2, %c0_3, %c0_4] : memref<2x8x128xf32, #tpu.memory_space<vmem>>, vector<2x8x128xf32>
    %2 = arith.addf %0, %1 : vector<2x8x128xf32>
    %cst = arith.constant 5.000000e-01 : f32
    %3 = vector.broadcast %cst : f32 to vector<2x8x128xf32>
    %4 = arith.mulf %2, %3 : vector<2x8x128xf32>
    %c0_5 = arith.constant 0 : index
    %c0_6 = arith.constant 0 : index
    %c0_7 = arith.constant 0 : index
    %5 = vector.load %arg4[%c0_5, %c0_6, %c0_7] : memref<2x8x128xf32, #tpu.memory_space<vmem>>, vector<2x8x128xf32>
    tpu.vector_store %arg4[%c0_5, %c0_6, %c0_7], %4 {strides = array<i32>} : memref<2x8x128xf32, #tpu.memory_space<vmem>>, vector<2x8x128xf32>,
    return
  }
  func.func @transform_0(%arg0: i32, %arg1: i32) -> (i32, i32, i32) {
    %c0_i32 = arith.constant 0 : i32
    %c0_i32_0 = arith.constant 0 : i32
    return %arg0, %arg1, %c0_i32 : i32, i32, i32
  }
  func.func @transform_1(%arg0: i32, %arg1: i32) -> (i32, i32, i32) {
    %c1_i32 = arith.constant 1 : i32
    %c0_i32 = arith.constant 0 : i32
    return %arg0, %arg1, %c1_i32 : i32, i32, i32
  }
  func.func @transform_2(%arg0: i32, %arg1: i32) -> (i32, i32, i32) {
    %c0_i32 = arith.constant 0 : i32
    %c0_i32_0 = arith.constant 0 : i32
    return %arg0, %arg1, %c0_i32 : i32, i32, i32
  }
}

</mosaic_0001>

<llo_original>
// kernel: tpu_custom_call.1
$region0: #{tpu_custom_call.1}
  #allocation0 [shape = 'u32[]', space=smem, size = 0x4, offset = 0x4, fixed_abs, tag = 'smem constant byte address 0x4 - core index']
  #allocation1 [shape = 'u32[72,128]{1,0:T(1,128)}', space=vmem, size = 0x9000, scoped, tag = 'internal scratch']
  %s0 = inlined_call_operand.hbm [shape: f32[2,8,256], index: 0, kind: input, shape index: {}]
  %s1 = inlined_call_operand.hbm [shape: f32[2,8,256], index: 1, kind: input, shape index: {}]
  %s2 = inlined_call_operand.hbm [shape: f32[2,8,128], index: 2, kind: output, shape index: {}]
  %s3 = sld [smem:[#allocation0]]
  $region26: #{tpu_custom_call.1} parent=0
    _
  %s5 = ssub.s32 1, %s3
  %s6 = scalar_select 0, %s5, %s3
  $region1: #{tpu_custom_call.1} parent=0
    #allocation2 [shape = 'u8[8192]{0}', space=vmem, size = 0x2000, scoped, tag = 'input window, operand 0, single buffered']
    #allocation3 [shape = 's32[1]{0}', space=sflag, size = 0x4, scoped, tag = 'scoped memory for tpu_custom_call.1']
    #allocation4 [shape = 's32[1]{0}', space=sflag, size = 0x4, scoped, tag = 'scoped memory for tpu_custom_call.1']
    #allocation5 [shape = 'u8[8192]{0}', space=vmem, size = 0x2000, scoped, tag = 'input window, operand 1, single buffered']
    #allocation6 [shape = 's32[1]{0}', space=sflag, size = 0x4, scoped, tag = 'scoped memory for tpu_custom_call.1']
    #allocation7 [shape = 'u8[8192]{0}', space=vmem, size = 0x2000, scoped, tag = 'output window, operand 0, single buffered']
    %7 = vsyncpa [#allocation3], 0
    %8 = vsyncpa [#allocation6], 0
    %9 = vsyncpa [#allocation4], 0
    // Predicated region
    $region2: #{tpu_custom_call.1} parent=1 // pred_check
      _
    $region3: #{tpu_custom_call.1} parent=1 // pred_check_branch
      %11 = sbr.rel (0) target = $region5
    $region4: #{tpu_custom_call.1} parent=1 // pred_region
      %13 = vsyncadd [#allocation3], 0
      %s14 = sshll.u32 %s0, 4
      %s15 = int_to_ptr.hbm [resolvable:$true] %s14
      %s16 = sshll.u32 [#allocation2], 4
      %s17 = int_to_ptr.vmem [resolvable:$true] %s16
      %22 = dma.hbm_to_vmem [thread:$0]  %s15, 256, %s17, [#allocation3], 256, 128, 8
    $region5: #{tpu_custom_call.1} parent=1 // pred_fallthru
      _
    // Predicated region
    $region6: #{tpu_custom_call.1} parent=1 // pred_check
      _
    $region7: #{tpu_custom_call.1} parent=1 // pred_check_branch
      %24 = sbr.rel (0) target = $region9
    $region8: #{tpu_custom_call.1} parent=1 // pred_region
      %26 = vsyncadd [#allocation6], 0
      %s27 = scalar_lea.hbm %s1, 8
      %s28 = sshll.u32 %s27, 4
      %s29 = int_to_ptr.hbm [resolvable:$true] %s28
      %s30 = sshll.u32 [#allocation5], 4
      %s31 = int_to_ptr.vmem [resolvable:$true] %s30
      %36 = dma.hbm_to_vmem [thread:$0]  %s29, 256, %s31, [#allocation6], 256, 128, 8
    $region9: #{tpu_custom_call.1} parent=1 // pred_fallthru
      _
    // Predicated region
    $region10: #{tpu_custom_call.1} parent=1 // pred_check
      _
    $region11: #{tpu_custom_call.1} parent=1 // pred_check_branch
      %38 = sbr.rel (0) target = $region13
    $region12: #{tpu_custom_call.1} parent=1 // pred_region
      %40 = dma.done [#allocation3], 256
    $region13: #{tpu_custom_call.1} parent=1 // pred_fallthru
      _
    // Predicated region
    $region14: #{tpu_custom_call.1} parent=1 // pred_check
      _
    $region15: #{tpu_custom_call.1} parent=1 // pred_check_branch
      %42 = sbr.rel (0) target = $region17
    $region16: #{tpu_custom_call.1} parent=1 // pred_region
      %44 = dma.done [#allocation6], 256
    $region17: #{tpu_custom_call.1} parent=1 // pred_fallthru
      _
    %v45 = vld [vmem:[#allocation2] sm:$0xff]
    %v46 = vld [vmem:[#allocation2 + $0x8] sm:$0xff]
    %v47 = vld [vmem:[#allocation5] sm:$0xff]
    %v48 = vld [vmem:[#allocation5 + $0x8] sm:$0xff]
    %v49 = vadd.f32 %v45, %v47
    %v50 = vadd.f32 %v46, %v48
    %v51 = vmul.f32 %v49, 0.5
    %v52 = vmul.f32 %v50, 0.5
    %53 = vst [vmem:[#allocation7] sm:$0xff] %v51
    %54 = vst [vmem:[#allocation7 + $0x8] sm:$0xff] %v52
    // Predicated region
    $region18: #{tpu_custom_call.1} parent=1 // pred_check
      _
    $region19: #{tpu_custom_call.1} parent=1 // pred_check_branch
      %56 = sbr.rel (0) target = $region21
    $region20: #{tpu_custom_call.1} parent=1 // pred_region
      %58 = vsyncadd [#allocation4], 0
      %s59 = sshll.u32 [#allocation7], 4
      %s60 = int_to_ptr.vmem [resolvable:$true] %s59
      %s61 = sshll.u32 %s2, 4
      %s62 = int_to_ptr.hbm [resolvable:$true] %s61
      %67 = dma.vmem_to_hbm [thread:$0]  %s60, 256, %s62, [#allocation4], 128, 128, 8
    $region21: #{tpu_custom_call.1} parent=1 // pred_fallthru
      _
    // Predicated region
    $region22: #{tpu_custom_call.1} parent=1 // pred_check
      _
    $region23: #{tpu_custom_call.1} parent=1 // pred_check_branch
      %69 = sbr.rel (0) target = $region25
    $region24: #{tpu_custom_call.1} parent=1 // pred_region
      %71 = dma.done [#allocation4], 256
    $region25: #{tpu_custom_call.1} parent=1 // pred_fallthru
      _
    %72 = vsyncpa [#allocation3], 1
    %73 = vsyncpa [#allocation6], 1
    %74 = vsyncpa [#allocation4], 1

</llo_original>
